<compile_context>
chip_gen: v6e
topology: v6e:2x2x1
jax: 0.10.0
libtpu: 0.0.40
codegen_flags: <defaults>
</compile_context>

<pallas_src>
import functools

import jax
import jax.numpy as jnp
from jax.experimental import pallas as pl
from jax.experimental.pallas import tpu as pltpu


_LANES = 128
_MAX_BLOCK_ROWS = 512          # 512*128*4B = 256 KiB per chunk per buffer
_PAIRED_PAD = 1e30             # padded paired value -> zero loss contribution


def _max_margin_kernel(x_ref, out_ref, *, margin, w1_over_b, w2_over_b,
                       two_rank):
    """x_ref: (n_chunks, block_rows, 128) f32 in VMEM; out_ref: (1,) f32 SMEM.

    Accumulates the (already weight/batch-scaled) partial sum into out_ref
    across the row-block grid axis.
    """
    step = pl.program_id(0)

    @pl.when(step == 0)
    def _init():
        out_ref[0] = jnp.float32(0.0)

    paired = x_ref[0].astype(jnp.float32)            # (block_rows, 128)
    mp = jnp.float32(margin) - paired                # hoisted, shared

    u1 = x_ref[1].astype(jnp.float32)
    partial = jnp.sum(jnp.maximum(mp + u1, 0.0)) * jnp.float32(w1_over_b)

    if two_rank:                                     # trace-time specialization
        u2 = x_ref[2].astype(jnp.float32)
        partial = partial + (jnp.sum(jnp.maximum(mp + u2, 0.0))
                             * jnp.float32(w2_over_b))

    out_ref[0] = out_ref[0] + partial


def _pack_chunks(chunks, pad_values, rows_p):
    """Pad each 1-D chunk to rows_p*128 and stack to (n_chunks, rows_p, 128)."""
    bp = rows_p * _LANES
    packed = []
    for chunk, pad_val in zip(chunks, pad_values):
        pad = bp - chunk.shape[0]
        if pad:
            chunk = jnp.concatenate(
                [chunk, jnp.full((pad,), pad_val, chunk.dtype)])
        packed.append(chunk.reshape(rows_p, _LANES))
    return jnp.stack(packed, axis=0)


def max_margin_criterion(cossim, visual_rank_weight, lang_rank_weight, margin):
    """JAX/Pallas equivalent of MaxMarginCriterion.forward."""
    visual_rank = visual_rank_weight > 0
    lang_rank = lang_rank_weight > 0
    n = cossim.shape[0]

    if visual_rank and lang_rank:
        batch_size = n // 3
        n_chunks = 3
        chunks = (cossim[:batch_size],
                  cossim[batch_size:2 * batch_size],
                  cossim[2 * batch_size:])
        w1 = float(visual_rank_weight)
        w2 = float(lang_rank_weight)
        two_rank = True
    elif visual_rank or lang_rank:
        batch_size = n // 2
        n_chunks = 2
        chunks = (cossim[:batch_size], cossim[batch_size:])
        w1 = float(visual_rank_weight) if visual_rank else float(lang_rank_weight)
        w2 = 0.0
        two_rank = False
    else:
        raise NotImplementedError

    # Lane-dense packing: rows of 128 lanes, optionally row-padded so the
    # block evenly divides the array.
    rows = pl.cdiv(batch_size, _LANES)
    if rows <= _MAX_BLOCK_ROWS:
        block_rows = rows
        rows_p = rows
    else:
        block_rows = _MAX_BLOCK_ROWS
        rows_p = pl.cdiv(rows, block_rows) * block_rows
    bp = rows_p * _LANES

    if bp == batch_size:
        # Chunks are contiguous slices of cossim -> single reshape, no copies.
        stacked = cossim.reshape(n_chunks, rows_p, _LANES)
    else:
        pad_values = (_PAIRED_PAD,) + (0.0,) * (n_chunks - 1)
        stacked = _pack_chunks(chunks, pad_values, rows_p)

    num_blocks = rows_p // block_rows

    kernel = functools.partial(
        _max_margin_kernel,
        margin=float(margin),
        w1_over_b=w1 / batch_size,
        w2_over_b=w2 / batch_size,
        two_rank=two_rank,
    )

    loss = pl.pallas_call(
        kernel,
        out_shape=jax.ShapeDtypeStruct((1,), jnp.float32),
        grid=(num_blocks,),
        in_specs=[
            pl.BlockSpec((n_chunks, block_rows, _LANES),
                         lambda i: (0, i, 0)),
        ],
        out_specs=pl.BlockSpec(memory_space=pltpu.SMEM),
        compiler_params=pltpu.CompilerParams(
            dimension_semantics=("arbitrary",)),
    )(stacked)
    return loss[0]


def _reference(cossim, visual_rank_weight, lang_rank_weight, margin):
    """Plain-JAX reference mirroring the PyTorch module."""
    visual_rank = visual_rank_weight > 0
    lang_rank = lang_rank_weight > 0
    n = cossim.shape[0]
    if visual_rank and lang_rank:
        b = n // 3
        paired = cossim[:b]
        vu = cossim[b:2 * b]
        lu = cossim[2 * b:]
        loss = (visual_rank_weight * jnp.maximum(margin + vu - paired, 0.0)
                + lang_rank_weight * jnp.maximum(margin + lu - paired, 0.0))
    elif visual_rank or lang_rank:
        b = n // 2
        paired = cossim[:b]
        unpaired = cossim[b:]
        w = visual_rank_weight if visual_rank else lang_rank_weight
        loss = w * jnp.maximum(margin + unpaired - paired, 0.0)
    else:
        raise NotImplementedError
    return loss.sum() / b


if __name__ == "__main__":
    margin = 0.1
    batch_size = 8
    key = jax.random.PRNGKey(0)

    # Case 1: both visual and lang ranking enabled -> N = 3 * batch_size.
    cossim3 = jax.random.uniform(key, (3 * batch_size,), jnp.float32,
                                 minval=-1.0, maxval=1.0)
    loss3 = jax.block_until_ready(
        max_margin_criterion(cossim3, 1.0, 0.5, margin))
    ref3 = _reference(cossim3, 1.0, 0.5, margin)
    assert jnp.allclose(loss3, ref3, atol=1e-5, rtol=1e-5), (loss3, ref3)

    # Case 2: visual ranking only -> N = 2 * batch_size (specialized kernel).
    cossim2 = jax.random.uniform(jax.random.fold_in(key, 1),
                                 (2 * batch_size,), jnp.float32,
                                 minval=-1.0, maxval=1.0)
    loss2 = jax.block_until_ready(
        max_margin_criterion(cossim2, 1.0, 0.0, margin))
    ref2 = _reference(cossim2, 1.0, 0.0, margin)
    assert jnp.allclose(loss2, ref2, atol=1e-5, rtol=1e-5), (loss2, ref2)

    print("KERNEL_OK")
</pallas_src>

<mosaic_0001>
module attributes {stable_mosaic.version = 11 : i64} {
  func.func @_max_margin_kernel(%arg0: i32, %arg1: memref<3x1x128xf32, #tpu.memory_space<vmem>>, %arg2: memref<1xf32, #tpu.memory_space<smem>>) attributes {dimension_semantics = [#tpu.dimension_semantics<arbitrary>], iteration_bounds = array<i64: 1>, scalar_prefetch = 0 : i64, scratch_operands = 0 : i64, tpu.core_type = #tpu.core_type<tc>, window_params = [{transform_indices = @transform_0, window_bounds = array<i64: 3, 1, 128>}, {transform_indices = @transform_1, window_bounds = array<i64: 1>}]} {
    %c0_i32 = arith.constant 0 : i32
    %0 = arith.cmpi eq, %arg0, %c0_i32 : i32
    %1 = arith.extui %0 : i1 to i32
    %c0_i32_0 = arith.constant 0 : i32
    %2 = arith.cmpi ne, %1, %c0_i32_0 : i32
    scf.if %2 {
      %cst_15 = arith.constant 0.000000e+00 : f32
      %c0_16 = arith.constant 0 : index
      %31 = memref.load %arg2[%c0_16] : memref<1xf32, #tpu.memory_space<smem>>
      memref.store %cst_15, %arg2[%c0_16] : memref<1xf32, #tpu.memory_space<smem>>
    } else {
    }
    %c0 = arith.constant 0 : index
    %c0_1 = arith.constant 0 : index
    %c0_2 = arith.constant 0 : index
    %3 = vector.load %arg1[%c0, %c0_1, %c0_2] : memref<3x1x128xf32, #tpu.memory_space<vmem>>, vector<1x1x128xf32>
    %4 = vector.shape_cast %3 : vector<1x1x128xf32> to vector<1x128xf32>
    %cst = arith.constant 1.000000e-01 : f32
    %5 = vector.broadcast %cst : f32 to vector<1x128xf32>
    %6 = arith.subf %5, %4 : vector<1x128xf32>
    %c1 = arith.constant 1 : index
    %c0_3 = arith.constant 0 : index
    %c0_4 = arith.constant 0 : index
    %7 = vector.load %arg1[%c1, %c0_3, %c0_4] : memref<3x1x128xf32, #tpu.memory_space<vmem>>, vector<1x1x128xf32>
    %8 = vector.shape_cast %7 : vector<1x1x128xf32> to vector<1x128xf32>
    %9 = arith.addf %6, %8 : vector<1x128xf32>
    %cst_5 = arith.constant 0.000000e+00 : f32
    %10 = vector.broadcast %cst_5 : f32 to vector<1x128xf32>
    %11 = arith.maximumf %9, %10 : vector<1x128xf32>
    %12 = vector.shape_cast %11 : vector<1x128xf32> to vector<1x1x128xf32>
    %cst_6 = arith.constant dense<0.000000e+00> : vector<1xf32>
    %13 = vector.multi_reduction <add>, %12, %cst_6 [1, 2] : vector<1x1x128xf32> to vector<1xf32>
    %14 = vector.shape_cast %13 : vector<1xf32> to vector<1x1x1xf32>
    %15 = vector.extract %14[0, 0, 0] : f32 from vector<1x1x1xf32>
    %cst_7 = arith.constant 1.250000e-01 : f32
    %16 = arith.mulf %15, %cst_7 : f32
    %c2 = arith.constant 2 : index
    %c0_8 = arith.constant 0 : index
    %c0_9 = arith.constant 0 : index
    %17 = vector.load %arg1[%c2, %c0_8, %c0_9] : memref<3x1x128xf32, #tpu.memory_space<vmem>>, vector<1x1x128xf32>
    %18 = vector.shape_cast %17 : vector<1x1x128xf32> to vector<1x128xf32>
    %19 = arith.addf %6, %18 : vector<1x128xf32>
    %cst_10 = arith.constant 0.000000e+00 : f32
    %20 = vector.broadcast %cst_10 : f32 to vector<1x128xf32>
    %21 = arith.maximumf %19, %20 : vector<1x128xf32>
    %22 = vector.shape_cast %21 : vector<1x128xf32> to vector<1x1x128xf32>
    %cst_11 = arith.constant dense<0.000000e+00> : vector<1xf32>
    %23 = vector.multi_reduction <add>, %22, %cst_11 [1, 2] : vector<1x1x128xf32> to vector<1xf32>
    %24 = vector.shape_cast %23 : vector<1xf32> to vector<1x1x1xf32>
    %25 = vector.extract %24[0, 0, 0] : f32 from vector<1x1x1xf32>
    %cst_12 = arith.constant 6.250000e-02 : f32
    %26 = arith.mulf %25, %cst_12 : f32
    %27 = arith.addf %16, %26 : f32
    %c0_13 = arith.constant 0 : index
    %28 = memref.load %arg2[%c0_13] : memref<1xf32, #tpu.memory_space<smem>>
    %29 = arith.addf %28, %27 : f32
    %c0_14 = arith.constant 0 : index
    %30 = memref.load %arg2[%c0_14] : memref<1xf32, #tpu.memory_space<smem>>
    memref.store %29, %arg2[%c0_14] : memref<1xf32, #tpu.memory_space<smem>>
    return
  }
  func.func @transform_0(%arg0: i32) -> (i32, i32, i32) {
    %c0_i32 = arith.constant 0 : i32
    %c0_i32_0 = arith.constant 0 : i32
    %c0_i32_1 = arith.constant 0 : i32
    return %c0_i32, %arg0, %c0_i32_0 : i32, i32, i32
  }
  func.func @transform_1(%arg0: i32) -> i32 {
    %c0_i32 = arith.constant 0 : i32
    %c0_i32_0 = arith.constant 0 : i32
    return %c0_i32 : i32
  }
}

</mosaic_0001>

<llo_original>
// kernel: tpu_custom_call.1
$region0: #{tpu_custom_call.1}
  #allocation0 [shape = 'u32[]', space=smem, size = 0x4, offset = 0x4, fixed_abs, tag = 'smem constant byte address 0x4 - core index']
  #allocation1 [shape = 'u32[144,128]{1,0:T(1,128)}', space=vmem, size = 0x12000, scoped, tag = 'internal scratch']
  %s0 = inlined_call_operand.hbm [shape: f32[3,1,128], index: 0, kind: input, shape index: {}]
  %s1 = inlined_call_operand.hbm [shape: f32[1], index: 1, kind: output, shape index: {}]
  %s2 = sld [smem:[#allocation0]]
  $region22: #{tpu_custom_call.1} parent=0
    _
  %s4 = ssub.s32 1, %s2
  %s5 = scalar_select 0, %s4, %s2
  $region1: #{tpu_custom_call.1} parent=0
    #allocation2 [shape = 'u8[1536]{0}', space=vmem, size = 0x800, scoped, tag = 'input window, operand 0, single buffered']
    #allocation3 [shape = 's32[1]{0}', space=sflag, size = 0x4, scoped, tag = 'scoped memory for tpu_custom_call.1']
    #allocation4 [shape = 's32[1]{0}', space=sflag, size = 0x4, scoped, tag = 'scoped memory for tpu_custom_call.1']
    #allocation5 [shape = 'u8[512]{0}', space=smem, size = 0x200, scoped, tag = 'output window, operand 0, single buffered']
    %6 = vsyncpa [#allocation3], 0
    %7 = vsyncpa [#allocation4], 0
    // Predicated region
    $region2: #{tpu_custom_call.1} parent=1 // pred_check
      _
    $region3: #{tpu_custom_call.1} parent=1 // pred_check_branch
      %9 = sbr.rel (0) target = $region5
    $region4: #{tpu_custom_call.1} parent=1 // pred_region
      %s11 = ssub.s32 48, 48
      %12 = vsyncadd [#allocation3], %s11
      %s13 = sshll.u32 [#allocation2], 4
      %s14 = int_to_ptr.vmem [resolvable:$true] %s13
      %19 = dma.hbm_to_vmem [thread:$0]  %s0, 48, %s14, [#allocation3], 16, 16, 1
    $region5: #{tpu_custom_call.1} parent=1 // pred_fallthru
      _
    // Predicated region
    $region6: #{tpu_custom_call.1} parent=1 // pred_check
      _
    $region7: #{tpu_custom_call.1} parent=1 // pred_check_branch
      %21 = sbr.rel (0) target = $region9
    $region8: #{tpu_custom_call.1} parent=1 // pred_region
      %22 = dma.done [#allocation3], 48
    $region9: #{tpu_custom_call.1} parent=1 // pred_fallthru
      _
    %p23 = scmp.eq.s32.totalorder 0, 0
    // Predicated region
    $region10: #{tpu_custom_call.1} parent=1 // pred_check
      %p24 = pneg %p23
    $region11: #{tpu_custom_call.1} parent=1 // pred_check_branch
      %26 = sbr.rel (%p24) target = $region13
    $region12: #{tpu_custom_call.1} parent=1 // pred_region
      %s27 = scalar_lea.smem [#allocation5], 0
      %28 = sst [smem:[%s27]] 0.0
    $region13: #{tpu_custom_call.1} parent=1 // pred_fallthru
      _
    %v29 = vld [vmem:[#allocation2] sm:$0x1]
    %v30 = vsub.f32 0.1, %v29
    %s31 = scalar_lea.vmem [#allocation2], 1
    %v32 = vld [vmem:[%s31] sm:$0x1]
    %v33 = vadd.f32 %v30, %v32
    %v34 = vmax.f32 %v33, 0.0
    %vm35 = vcmask 1040384
    %v36 = vsel %vm35, %v34, 0.0
    %37 = vadd.xlane.f32.xlu0 %v36
    %v38 = vpop.xlane.xlu0 %37
    %v39 = vrot.slane %v38, 4
    %v40 = vadd.f32 %v38, %v39
    %v41 = vrot.slane %v40, 2
    %v42 = vadd.f32 %v40, %v41
    %v43 = vrot.slane %v42, 1
    %v44 = vadd.f32 %v42, %v43
    %s45 = vtos %v44
    %s46 = smul.f32 %s45, 0.125
    %s47 = scalar_lea.vmem [#allocation2], 2
    %v48 = vld [vmem:[%s47] sm:$0x1]
    %v49 = vadd.f32 %v30, %v48
    %v50 = vmax.f32 %v49, 0.0
    %v51 = vsel %vm35, %v50, 0.0
    %52 = vadd.xlane.f32.xlu0 %v51
    %v53 = vpop.xlane.xlu0 %52
    %v54 = vrot.slane %v53, 4
    %v55 = vadd.f32 %v53, %v54
    %v56 = vrot.slane %v55, 2
    %v57 = vadd.f32 %v55, %v56
    %v58 = vrot.slane %v57, 1
    %v59 = vadd.f32 %v57, %v58
    %s60 = vtos %v59
    %s61 = smul.f32 %s60, 0.0625
    %s62 = sadd.f32 %s46, %s61
    %s63 = sld [smem:[#allocation5]]
    %s64 = sadd.f32 %s63, %s62
    %s65 = scalar_lea.smem [#allocation5], 0
    %66 = sst [smem:[%s65]] %s64
    // Predicated region
    $region14: #{tpu_custom_call.1} parent=1 // pred_check
      _
    $region15: #{tpu_custom_call.1} parent=1 // pred_check_branch
      %68 = sbr.rel (0) target = $region17
    $region16: #{tpu_custom_call.1} parent=1 // pred_region
      %s70 = ssub.s32 16, 16
      %71 = vsyncadd [#allocation4], %s70
      %74 = dma.smem_to_hbm [#allocation5], 16, %s1, [#allocation4]
    $region17: #{tpu_custom_call.1} parent=1 // pred_fallthru
      _
    // Predicated region
    $region18: #{tpu_custom_call.1} parent=1 // pred_check
      _
    $region19: #{tpu_custom_call.1} parent=1 // pred_check_branch
      %76 = sbr.rel (0) target = $region21
    $region20: #{tpu_custom_call.1} parent=1 // pred_region
      %77 = dma.done [#allocation4], 16
    $region21: #{tpu_custom_call.1} parent=1 // pred_fallthru
      _
    %78 = sfence
    %79 = vsyncpa [#allocation3], 1
    %80 = vsyncpa [#allocation4], 1

</llo_original>
